<compile_context>
chip_gen: v5e
topology: v5e:2x2
jax: 0.10.0
libtpu: 0.0.40
codegen_flags: <defaults>
</compile_context>

<pallas_src>
import jax
import jax.numpy as jnp
from jax.experimental import pallas as pl
from jax.experimental.pallas import tpu as pltpu  # noqa: F401  (TPU backend import)


def _palmtree_kernel(x_ref, w_ref, posb_ref, o_ref):
    # x_ref:    (B*S, E)  flattened batch of sequence embeddings
    # w_ref:    (E, V)    linear weight, already transposed to (in, out)
    # posb_ref: (B*S, V)  pos_emb tiled over batch, with bias pre-folded in
    # o_ref:    (B*S, V)
    y = jnp.dot(x_ref[...], w_ref[...], preferred_element_type=jnp.float32)  # MXU
    o_ref[...] = (y + posb_ref[...]).astype(o_ref.dtype)


@jax.jit
def palmtree_seq_forward(x, weight, bias, pos_emb):
    """x: (B, S, E); weight: (V, E) (PyTorch layout); bias: (V,); pos_emb: (S, V)."""
    B, S, E = x.shape
    V = weight.shape[0]

    x2d = x.reshape(B * S, E)                       # (B*S, E)
    w_t = weight.T                                  # (E, V)  — fused under jit
    pos_plus_bias = pos_emb + bias[None, :]         # (S, V)  — bias folded on host
    posb = jnp.tile(pos_plus_bias, (B, 1))          # (B*S, V), tiny (16x32)

    out2d = pl.pallas_call(
        _palmtree_kernel,
        out_shape=jax.ShapeDtypeStruct((B * S, V), x.dtype),
        # No grid / no BlockSpecs: single invocation, full arrays resident in VMEM.
    )(x2d, w_t, posb)

    return out2d.reshape(B, S, V)


def reference_forward(x, weight, bias, pos_emb):
    # Pure-JAX reference mirroring the PyTorch module.
    y = jnp.einsum("bse,ve->bsv", x, weight) + bias
    return y + pos_emb[None, :, :]


if __name__ == "__main__":
    # Small shapes consistent with the module's forward:
    #   size (seq len) = 8, palmtreeemb_size = 32, visual_feature_size = 32, batch = 2
    batch, size, palmtreeemb_size, visual_feature_size = 2, 8, 32, 32

    key = jax.random.PRNGKey(0)
    k_x, k_w, k_b, k_p = jax.random.split(key, 4)

    x = jax.random.normal(k_x, (batch, size, palmtreeemb_size), dtype=jnp.float32)
    # Deterministic parameter init (synthetic; not a checkpoint load).
    weight = jax.random.normal(
        k_w, (visual_feature_size, palmtreeemb_size), dtype=jnp.float32
    ) * (1.0 / jnp.sqrt(palmtreeemb_size))
    bias = jax.random.normal(k_b, (visual_feature_size,), dtype=jnp.float32) * 0.01
    pos_emb = jax.random.normal(
        k_p, (size, visual_feature_size), dtype=jnp.float32
    )

    out = palmtree_seq_forward(x, weight, bias, pos_emb)
    out = jax.block_until_ready(out)

    ref = reference_forward(x, weight, bias, pos_emb)
    assert out.shape == (batch, size, visual_feature_size)
    assert jnp.allclose(out, ref, atol=1e-5, rtol=1e-5), "mismatch vs reference"

    print("KERNEL_OK")
</pallas_src>

<mosaic_0001>
module attributes {stable_mosaic.version = 11 : i64} {
  func.func @_palmtree_kernel(%arg0: memref<16x32xf32, #tpu.memory_space<vmem>>, %arg1: memref<32x32xf32, #tpu.memory_space<vmem>>, %arg2: memref<16x32xf32, #tpu.memory_space<vmem>>, %arg3: memref<16x32xf32, #tpu.memory_space<vmem>>) attributes {dimension_semantics = [], scalar_prefetch = 0 : i64, scratch_operands = 0 : i64, tpu.core_type = #tpu.core_type<tc>} {
    %c0 = arith.constant 0 : index
    %c0_0 = arith.constant 0 : index
    %0 = vector.load %arg0[%c0, %c0_0] : memref<16x32xf32, #tpu.memory_space<vmem>>, vector<16x32xf32>
    %c0_1 = arith.constant 0 : index
    %c0_2 = arith.constant 0 : index
    %1 = vector.load %arg1[%c0_1, %c0_2] : memref<32x32xf32, #tpu.memory_space<vmem>>, vector<32x32xf32>
    %cst = arith.constant dense<0.000000e+00> : vector<16x32xf32>
    %2 = tpu.matmul %0, %1, %cst {dimension_numbers = #tpu.dot_dimension_numbers<[1], [0], [0], [1], [0, 0, 1, 1], [], []>} : vector<16x32xf32>, vector<32x32xf32>, vector<16x32xf32> -> vector<16x32xf32>
    %c0_3 = arith.constant 0 : index
    %c0_4 = arith.constant 0 : index
    %3 = vector.load %arg2[%c0_3, %c0_4] : memref<16x32xf32, #tpu.memory_space<vmem>>, vector<16x32xf32>
    %4 = arith.addf %2, %3 : vector<16x32xf32>
    %c0_5 = arith.constant 0 : index
    %c0_6 = arith.constant 0 : index
    %5 = vector.load %arg3[%c0_5, %c0_6] : memref<16x32xf32, #tpu.memory_space<vmem>>, vector<16x32xf32>
    tpu.vector_store %arg3[%c0_5, %c0_6], %4 {strides = array<i32>} : memref<16x32xf32, #tpu.memory_space<vmem>>, vector<16x32xf32>,
    return
  }
}

</mosaic_0001>

<llo_original>
// kernel: palmtree_seq_forward.1
$region0: #{palmtree_seq_forward.1}
  #allocation0 [shape = 'u32[]', space=smem, size = 0x4, offset = 0x4, fixed_abs, tag = 'smem constant byte address 0x4 - core index']
  #allocation1 [shape = 'u32[72,128]{1,0:T(1,128)}', space=vmem, size = 0x9000, scoped, tag = 'internal scratch']
  %s0 = inlined_call_operand.vmem [shape: f32[16,32], index: 0, kind: input, shape index: {}]
  %s1 = inlined_call_operand.vmem [shape: f32[32,32], index: 1, kind: input, shape index: {}]
  %s2 = inlined_call_operand.vmem [shape: f32[16,32], index: 2, kind: input, shape index: {}]
  %s3 = inlined_call_operand.hbm [shape: f32[16,32], index: 3, kind: output, shape index: {}]
  %s4 = sld [smem:[#allocation0]]
  $region22: #{palmtree_seq_forward.1} parent=0
    _
  %s6 = ssub.s32 1, %s4
  %s7 = scalar_select 0, %s6, %s4
  $region1: #{palmtree_seq_forward.1} parent=0
    #allocation2 [shape = 'u8[8192]{0}', space=vmem, size = 0x2000, scoped, tag = 'output window, operand 0, single buffered']
    #allocation3 [shape = 's32[1]{0}', space=sflag, size = 0x4, scoped, tag = 'scoped memory for palmtree_seq_forward.1']
    %8 = vsyncpa [#allocation3], 0
    // Predicated region
    $region2: #{palmtree_seq_forward.1} parent=1 // pred_check
      _
    $region3: #{palmtree_seq_forward.1} parent=1 // pred_check_branch
      %10 = sbr.rel (0) target = $region5
    $region4: #{palmtree_seq_forward.1} parent=1 // pred_region
      _
    $region5: #{palmtree_seq_forward.1} parent=1 // pred_fallthru
      _
    // Predicated region
    $region6: #{palmtree_seq_forward.1} parent=1 // pred_check
      _
    $region7: #{palmtree_seq_forward.1} parent=1 // pred_check_branch
      %12 = sbr.rel (0) target = $region9
    $region8: #{palmtree_seq_forward.1} parent=1 // pred_region
      _
    $region9: #{palmtree_seq_forward.1} parent=1 // pred_fallthru
      _
    // Predicated region
    $region10: #{palmtree_seq_forward.1} parent=1 // pred_check
      _
    $region11: #{palmtree_seq_forward.1} parent=1 // pred_check_branch
      %14 = sbr.rel (0) target = $region13
    $region12: #{palmtree_seq_forward.1} parent=1 // pred_region
      _
    $region13: #{palmtree_seq_forward.1} parent=1 // pred_fallthru
      _
    %v15 = vld [vmem:[%s0] sm:$0xff]
    %v16 = vld [vmem:[%s0 + $0x8] sm:$0xff]
    %v17 = vld [vmem:[%s1] sm:$0xff]
    %v18 = vld [vmem:[%s1 + $0x8] sm:$0xff]
    %v19 = vld [vmem:[%s1 + $0x10] sm:$0xff]
    %v20 = vld [vmem:[%s1 + $0x18] sm:$0xff]
    %v21 = vld [vmem:[%s2] sm:$0xff]
    %v22 = vld [vmem:[%s2 + $0x8] sm:$0xff]
    %vm23 = vcmask 261120
    %v25 = vsel %vm23, %v15, 0
    %v28 = vsel %vm23, %v16, 0
    %30 = vmatpush.msra.mxu0 0.0
    %31 = vmatpush.msra.mxu0 0.0
    %32 = vmatpush.msra.mxu0 0.0
    %33 = vmatpush.msra.mxu0 0.0
    %34 = vmatpush.msra.mxu0 0.0
    %35 = vmatpush.msra.mxu0 0.0
    %36 = vmatpush.msra.mxu0 0.0
    %37 = vmatpush.msra.mxu0 0.0
    %38 = vmatpush.msra.mxu0 0.0
    %39 = vmatpush.msra.mxu0 0.0
    %40 = vmatpush.msra.mxu0 0.0
    %41 = vmatpush.msra.mxu0 0.0
    %42 = vmatpush.msra.mxu0 %v20
    %43 = vmatpush.msra.mxu0 %v19
    %44 = vmatpush.msra.mxu0 %v18
    %45 = vmatpush.msra.mxu0 %v17
    %46 = vmatmul.f32.gmra.mxu0 %v25
    %v47 = vpop.f32.mrf.mxu0
    %v48 = vadd.f32 %v21, %v47
    %49 = vmatmul.f32.gmra.mxu0 %v28
    %v50 = vpop.f32.mrf.mxu0
    %v51 = vadd.f32 %v22, %v50
    %52 = vdwg.mxu0
    %53 = vst.msk [vmem:[#allocation2] sm:$0xff] %vm23, %v48
    %54 = vst.msk [vmem:[#allocation2 + $0x8] sm:$0xff] %vm23, %v51
    // Predicated region
    $region14: #{palmtree_seq_forward.1} parent=1 // pred_check
      _
    $region15: #{palmtree_seq_forward.1} parent=1 // pred_check_branch
      %56 = sbr.rel (0) target = $region17
    $region16: #{palmtree_seq_forward.1} parent=1 // pred_region
      %58 = vsyncadd [#allocation3], 0
      %s59 = sshll.u32 [#allocation2], 4
      %s60 = int_to_ptr.vmem [resolvable:$true] %s59
      %s61 = sshll.u32 %s3, 4
      %s62 = int_to_ptr.hbm [resolvable:$true] %s61
      %67 = dma.vmem_to_hbm [thread:$0]  %s60, 256, %s62, [#allocation3], 128, 128, 8
    $region17: #{palmtree_seq_forward.1} parent=1 // pred_fallthru
      _
    // Predicated region
    $region18: #{palmtree_seq_forward.1} parent=1 // pred_check
      _
    $region19: #{palmtree_seq_forward.1} parent=1 // pred_check_branch
      %69 = sbr.rel (0) target = $region21
    $region20: #{palmtree_seq_forward.1} parent=1 // pred_region
      %71 = dma.done [#allocation3], 256
    $region21: #{palmtree_seq_forward.1} parent=1 // pred_fallthru
      _
    %72 = vsyncpa [#allocation3], 1

</llo_original>
